<compile_context>
chip_gen: v7x
topology: tpu7x:2x2x1
jax: 0.10.0
libtpu: 0.0.40
codegen_flags: <defaults>
</compile_context>

<pallas_src>
import jax
import jax.numpy as jnp
from jax.experimental import pallas as pl
from jax.experimental.pallas import tpu as pltpu

_LANES = 1024                 # 8 * 128: lane-dense, unmasked vector stores
_DEFAULT_BLOCK_ROWS = 1024    # 1024 x 1024 f32 = 4 MiB row tile
_MIN_NOPAD_BLOCK_ROWS = 128   # below this, prefer padding to big tiles


def _vmem_limit_bytes() -> int:
    """Generation-aware scoped-VMEM limit (~75% of physical per-core VMEM)."""
    cap = 64 * 1024 * 1024                       # conservative default (v7x)
    try:
        info = pltpu.get_tpu_info()
        cap = int(getattr(info, "vmem_capacity_bytes", cap))
    except Exception:
        pass
    return (cap // 4) * 3                        # leave headroom for scratch


def _choose_block_rows(rows: int, sub: int, max_block_rows: int):
    """Largest divisor of `rows` that is a multiple of `sub`, <= max_block_rows."""
    bs = (min(max_block_rows, rows) // sub) * sub
    while bs >= sub:
        if rows % bs == 0:
            return bs
        bs -= sub
    return None


# ---------- fused single-block path (whole slab resident in VMEM, 2N traffic)
def _fused_kernel(x_ref, o_ref):
    e = jnp.exp(x_ref[...].astype(jnp.float32))
    s = jnp.sum(e, keepdims=True)                # (1, 1)
    o_ref[...] = (e * (1.0 / s)).astype(o_ref.dtype)


# ---------- tiled two-pass path ----------------------------------------------
def _partial_sumexp_kernel(x_ref, psum_ref):
    # Each grid step writes its OWN partial-sum block => the grid axis is
    # fully "parallel" (megacore sharding on v7x); no resident accumulator.
    e = jnp.exp(x_ref[...].astype(jnp.float32))
    psum_ref[...] = jnp.broadcast_to(jnp.sum(e), psum_ref.shape)


def _scale_kernel(x_ref, inv_ref, o_ref):
    # Recompute exp (cheap EUP work, hidden under the HBM stream) instead of
    # storing the f32 intermediate; scale by the precomputed SMEM scalar.
    e = jnp.exp(x_ref[...].astype(jnp.float32))
    o_ref[...] = (e * inv_ref[0, 0]).astype(o_ref.dtype)


def softmax_global(x: jax.Array,
                   *,
                   max_block_rows: int = _DEFAULT_BLOCK_ROWS,
                   fused_max_elems=None) -> jax.Array:
    """exp(x) / sum(exp(x)) over the ENTIRE tensor (matches the torch module)."""
    assert jnp.issubdtype(x.dtype, jnp.floating), "softmax expects float input"
    orig_shape, orig_dtype = x.shape, x.dtype
    n = x.size

    itemsize = jnp.dtype(orig_dtype).itemsize
    sub = {4: 8, 2: 16, 1: 32}.get(itemsize, 8)          # sublane multiple
    max_block_rows = max(sub, (max_block_rows // sub) * sub)

    vmem_limit = _vmem_limit_bytes()
    if fused_max_elems is None:
        # Fused path holds input + f32 exp intermediate + output in VMEM;
        # budget ~24 bytes/element against the scoped limit.
        fused_max_elems = vmem_limit // 24

    # ---- layout plumbing: lane-dense [rows, 1024] slab ----------------------
    rows = pl.cdiv(n, _LANES)
    flat = x.reshape(-1)

    if rows * _LANES <= fused_max_elems:
        # ---- small/mid input: single fused, fully VMEM-resident kernel -----
        if rows * _LANES != n:
            pad_val = float(jnp.finfo(orig_dtype).min)   # exp(pad) == 0
            flat = jnp.pad(flat, (0, rows * _LANES - n), constant_values=pad_val)
        x2d = flat.reshape(rows, _LANES)
        out2d = pl.pallas_call(
            _fused_kernel,
            out_shape=jax.ShapeDtypeStruct(x2d.shape, orig_dtype),
            in_specs=[pl.BlockSpec(memory_space=pltpu.MemorySpace.VMEM)],
            out_specs=pl.BlockSpec(memory_space=pltpu.MemorySpace.VMEM),
            compiler_params=pltpu.CompilerParams(vmem_limit_bytes=vmem_limit),
        )(x2d)
        # TODO(synk): for inputs just above this threshold, a streamed
        # VMEM-resident path (pltpu.emit_pipeline over a resident slab) would
        # keep traffic at 2N with full DMA/compute overlap.
    else:
        # ---- large input: tiled two-pass (3N HBM traffic) ------------------
        block_rows = None
        if n == rows * _LANES:                           # aligned: try no-pad
            block_rows = _choose_block_rows(rows, sub, max_block_rows)
            if (block_rows is not None
                    and block_rows < min(_MIN_NOPAD_BLOCK_ROWS, max_block_rows)):
                block_rows = None                        # tiles too small
        if block_rows is None:                           # ragged fallback
            block_rows = max_block_rows
            rows = pl.cdiv(rows, block_rows) * block_rows

        n_padded = rows * _LANES
        if n_padded != n:
            # Only triggers for ragged sizes; exp(most-negative finite) == 0.
            # TODO(synk): mask the ragged tail inside the last tile instead of
            # this full-tensor pad copy.
            pad_val = float(jnp.finfo(orig_dtype).min)
            flat = jnp.pad(flat, (0, n_padded - n), constant_values=pad_val)
        x2d = flat.reshape(rows, _LANES)
        num_tiles = rows // block_rows

        row_tile = pl.BlockSpec((block_rows, _LANES), lambda i: (i, 0))

        # ---- pass 1: per-tile partial sums of exp(x), fully parallel --------
        partials = pl.pallas_call(
            _partial_sumexp_kernel,
            out_shape=jax.ShapeDtypeStruct((num_tiles, 8, 128), jnp.float32),
            grid=(num_tiles,),
            in_specs=[row_tile],
            out_specs=pl.BlockSpec((1, 8, 128), lambda i: (i, 0, 0)),
            compiler_params=pltpu.CompilerParams(
                dimension_semantics=("parallel",),
                vmem_limit_bytes=vmem_limit),
        )(x2d)

        # Tiny reduction + exact reciprocal once, in the wrapper.
        total = jnp.sum(partials[:, 0, 0])
        inv_total = (1.0 / total).astype(jnp.float32).reshape(1, 1)

        # ---- pass 2: y = exp(x) * inv_total; tiles independent -> parallel --
        out2d = pl.pallas_call(
            _scale_kernel,
            out_shape=jax.ShapeDtypeStruct(x2d.shape, orig_dtype),
            grid=(num_tiles,),
            in_specs=[row_tile,
                      pl.BlockSpec(memory_space=pltpu.MemorySpace.SMEM)],
            out_specs=row_tile,
            compiler_params=pltpu.CompilerParams(
                dimension_semantics=("parallel",),
                vmem_limit_bytes=vmem_limit),
        )(x2d, inv_total)

    out = out2d.reshape(-1)
    if out.size != n:
        out = out[:n]
    return out.reshape(orig_shape)


def _reference(x):
    e = jnp.exp(x.astype(jnp.float32))
    return (e / jnp.sum(e)).astype(x.dtype)


if __name__ == "__main__":
    k1, k2, k3 = jax.random.split(jax.random.PRNGKey(0), 3)

    # 1) Small shape consistent with the module (seq=8, hidden=32): fused path.
    x = jax.random.normal(k1, (8, 32), dtype=jnp.float32)
    out = jax.block_until_ready(softmax_global(x))
    ref = _reference(x)
    assert out.shape == x.shape and out.dtype == x.dtype
    assert jnp.allclose(out, ref, rtol=1e-4, atol=1e-8), "fused path mismatch"
    assert jnp.allclose(jnp.sum(out), 1.0, atol=1e-3)

    # 2) Aligned input, tiled two-pass path forced (no padding triggered):
    #    exercises parallel partial-sum pass + SMEM scalar pass 2.
    x2 = jax.random.normal(k2, (32, 1024), dtype=jnp.float32)
    out2 = jax.block_until_ready(
        softmax_global(x2, max_block_rows=8, fused_max_elems=0))
    ref2 = _reference(x2)
    assert out2.shape == x2.shape and out2.dtype == x2.dtype
    assert jnp.allclose(out2, ref2, rtol=1e-4, atol=1e-9), "tiled path mismatch"
    assert jnp.allclose(jnp.sum(out2), 1.0, atol=1e-3)

    # 3) Ragged input, tiled path forced: exercises the padding fallback.
    x3 = jax.random.normal(k3, (100, 257), dtype=jnp.float32)
    out3 = jax.block_until_ready(
        softmax_global(x3, max_block_rows=8, fused_max_elems=0))
    ref3 = _reference(x3)
    assert out3.shape == x3.shape and out3.dtype == x3.dtype
    assert jnp.allclose(out3, ref3, rtol=1e-4, atol=1e-9), "ragged path mismatch"
    assert jnp.allclose(jnp.sum(out3), 1.0, atol=1e-3)

    print("KERNEL_OK")
</pallas_src>

<mosaic_0001>
module attributes {stable_mosaic.version = 11 : i64} {
  func.func @_fused_kernel(%arg0: memref<1x1024xf32, #tpu.memory_space<vmem>>, %arg1: memref<1x1024xf32, #tpu.memory_space<vmem>>) attributes {dimension_semantics = [], scalar_prefetch = 0 : i64, scratch_operands = 0 : i64, tpu.core_type = #tpu.core_type<tc>} {
    %c0 = arith.constant 0 : index
    %c0_0 = arith.constant 0 : index
    %0 = vector.load %arg0[%c0, %c0_0] : memref<1x1024xf32, #tpu.memory_space<vmem>>, vector<1x1024xf32>
    %1 = math.exp %0 : vector<1x1024xf32>
    %2 = vector.shape_cast %1 : vector<1x1024xf32> to vector<1x1x1024xf32>
    %cst = arith.constant dense<0.000000e+00> : vector<1xf32>
    %3 = vector.multi_reduction <add>, %2, %cst [1, 2] : vector<1x1x1024xf32> to vector<1xf32>
    %4 = vector.shape_cast %3 : vector<1xf32> to vector<1x1x1xf32>
    %5 = vector.extract %4[0, 0, 0] : f32 from vector<1x1x1xf32>
    %6 = vector.broadcast %5 : f32 to vector<1x1xf32>
    %cst_1 = arith.constant 1.000000e+00 : f32
    %7 = vector.broadcast %cst_1 : f32 to vector<1x1xf32>
    %8 = arith.divf %7, %6 : vector<1x1xf32>
    %9 = vector.broadcast %8 : vector<1x1xf32> to vector<1x1024xf32>
    %10 = arith.mulf %1, %9 : vector<1x1024xf32>
    %c0_2 = arith.constant 0 : index
    %c0_3 = arith.constant 0 : index
    %11 = vector.load %arg1[%c0_2, %c0_3] : memref<1x1024xf32, #tpu.memory_space<vmem>>, vector<1x1024xf32>
    tpu.vector_store %arg1[%c0_2, %c0_3], %10 {strides = array<i32>} : memref<1x1024xf32, #tpu.memory_space<vmem>>, vector<1x1024xf32>,
    return
  }
}

</mosaic_0001>

<llo_original>
// kernel: tpu_custom_call.1
$region0: #{tpu_custom_call.1}
  #allocation0 [shape = 'u32[]', space=smem, size = 0x4, offset = 0x4, fixed_abs, tag = 'smem constant byte address 0x4 - core index']
  #allocation1 [shape = 'u32[144,128]{1,0:T(1,128)}', space=vmem, size = 0x12000, scoped, tag = 'internal scratch']
  %s0 = inlined_call_operand.hbm [shape: f32[1,1024], index: 0, kind: input, shape index: {}]
  %s1 = inlined_call_operand.hbm [shape: f32[1,1024], index: 1, kind: output, shape index: {}]
  %s2 = sld [smem:[#allocation0]]
  $region18: #{tpu_custom_call.1} parent=0
    _
  %s4 = ssub.s32 1, %s2
  %s5 = scalar_select 0, %s4, %s2
  $region1: #{tpu_custom_call.1} parent=0
    #allocation2 [shape = 'u8[4096]{0}', space=vmem, size = 0x1000, scoped, tag = 'input window, operand 0, single buffered']
    #allocation3 [shape = 's32[1]{0}', space=sflag, size = 0x4, scoped, tag = 'scoped memory for tpu_custom_call.1']
    #allocation4 [shape = 's32[1]{0}', space=sflag, size = 0x4, scoped, tag = 'scoped memory for tpu_custom_call.1']
    #allocation5 [shape = 'u8[4096]{0}', space=vmem, size = 0x1000, scoped, tag = 'output window, operand 0, single buffered']
    %6 = vsyncpa [#allocation3], 0
    %7 = vsyncpa [#allocation4], 0
    // Predicated region
    $region2: #{tpu_custom_call.1} parent=1 // pred_check
      _
    $region3: #{tpu_custom_call.1} parent=1 // pred_check_branch
      %9 = sbr.rel (0) target = $region5
    $region4: #{tpu_custom_call.1} parent=1 // pred_region
      %s11 = ssub.s32 128, 128
      %12 = vsyncadd [#allocation3], %s11
      %s14 = sshll.u32 [#allocation2], 4
      %s15 = int_to_ptr.vmem [resolvable:$true] %s14
      %17 = dma.hbm_to_vmem [thread:$0]  %s0, 128, %s15, [#allocation3]
    $region5: #{tpu_custom_call.1} parent=1 // pred_fallthru
      _
    // Predicated region
    $region6: #{tpu_custom_call.1} parent=1 // pred_check
      _
    $region7: #{tpu_custom_call.1} parent=1 // pred_check_branch
      %19 = sbr.rel (0) target = $region9
    $region8: #{tpu_custom_call.1} parent=1 // pred_region
      %20 = dma.done [#allocation3], 128
    $region9: #{tpu_custom_call.1} parent=1 // pred_fallthru
      _
    %v21 = vld [vmem:[#allocation2] sm:$0xff]
    %v22 = vmul.f32 %v21, 1.442695
    %v23 = vpow.pop %v22
    %v25 = vlaneseq
    %v26 = vshrl.u32 %v25, 7
    %v27 = vsub.s32 0, %v26
    %v28 = vrot.slane %v23, %v27
    %v29 = vlaneseq
    %v30 = vshrl.u32 %v29, 7
    %v31 = vsub.s32 1, %v30
    %v32 = vrot.slane %v23, %v31
    %v33 = vlaneseq
    %v34 = vshrl.u32 %v33, 7
    %v35 = vsub.s32 2, %v34
    %v36 = vrot.slane %v23, %v35
    %v37 = vlaneseq
    %v38 = vshrl.u32 %v37, 7
    %v39 = vsub.s32 3, %v38
    %v40 = vrot.slane %v23, %v39
    %v41 = vlaneseq
    %v42 = vshrl.u32 %v41, 7
    %v43 = vsub.s32 4, %v42
    %v44 = vrot.slane %v23, %v43
    %v45 = vlaneseq
    %v46 = vshrl.u32 %v45, 7
    %v47 = vsub.s32 5, %v46
    %v48 = vrot.slane %v23, %v47
    %v49 = vlaneseq
    %v50 = vshrl.u32 %v49, 7
    %v51 = vsub.s32 6, %v50
    %v52 = vrot.slane %v23, %v51
    %v53 = vlaneseq
    %v54 = vshrl.u32 %v53, 7
    %v55 = vsub.s32 7, %v54
    %v56 = vrot.slane %v23, %v55
    %vm65 = vcmask 1040384
    %v66 = vsel %vm65, %v28, 0.0
    %v67 = vsel %vm65, %v32, 0.0
    %v68 = vadd.f32 %v66, %v67
    %v69 = vsel %vm65, %v36, 0.0
    %v70 = vadd.f32 %v68, %v69
    %v71 = vsel %vm65, %v40, 0.0
    %v72 = vadd.f32 %v70, %v71
    %v73 = vsel %vm65, %v44, 0.0
    %v74 = vadd.f32 %v72, %v73
    %v75 = vsel %vm65, %v48, 0.0
    %v76 = vadd.f32 %v74, %v75
    %v77 = vsel %vm65, %v52, 0.0
    %v78 = vadd.f32 %v76, %v77
    %v79 = vsel %vm65, %v56, 0.0
    %v80 = vadd.f32 %v78, %v79
    %81 = vadd.xlane.f32.xlu0 %v80
    %v82 = vpop.xlane.xlu0 %81
    %v83 = vrot.slane %v82, 4
    %v84 = vadd.f32 %v82, %v83
    %v85 = vrot.slane %v84, 2
    %v86 = vadd.f32 %v84, %v85
    %v87 = vrot.slane %v86, 1
    %v88 = vadd.f32 %v86, %v87
    %s89 = vtos %v88
    %v90 = vstv %s89
    %v91 = vrcp.pop %v90
    %v92 = vmul.f32 1.0, %v91
    %v93 = vmul.f32 %v23, %v92
    %94 = vst [vmem:[#allocation5] sm:$0xff] %v93
    // Predicated region
    $region10: #{tpu_custom_call.1} parent=1 // pred_check
      _
    $region11: #{tpu_custom_call.1} parent=1 // pred_check_branch
      %96 = sbr.rel (0) target = $region13
    $region12: #{tpu_custom_call.1} parent=1 // pred_region
      %s98 = ssub.s32 128, 128
      %99 = vsyncadd [#allocation4], %s98
      %s101 = sshll.u32 [#allocation5], 4
      %s102 = int_to_ptr.vmem [resolvable:$true] %s101
      %104 = dma.vmem_to_hbm [thread:$0]  %s102, 128, %s1, [#allocation4]
    $region13: #{tpu_custom_call.1} parent=1 // pred_fallthru
      _
    // Predicated region
    $region14: #{tpu_custom_call.1} parent=1 // pred_check
      _
    $region15: #{tpu_custom_call.1} parent=1 // pred_check_branch
      %106 = sbr.rel (0) target = $region17
    $region16: #{tpu_custom_call.1} parent=1 // pred_region
      %107 = dma.done [#allocation4], 128
    $region17: #{tpu_custom_call.1} parent=1 // pred_fallthru
      _
    %108 = vsyncpa [#allocation3], 1
    %109 = vsyncpa [#allocation4], 1

</llo_original>
